<compile_context>
chip_gen: v7x
topology: tpu7x:2x2x1
jax: 0.10.0
libtpu: 0.0.40
codegen_flags: <defaults>
</compile_context>

<pallas_src>
import functools

import jax
import jax.numpy as jnp
from jax import lax
from jax.experimental import pallas as pl
from jax.experimental.pallas import tpu as pltpu


def _softmax_loss_allneg_kernel(counts_ref, scores_ref, out_ref,
                                m_ref, l_ref, acc_ref,
                                *, n_total, tn, inv_b, needs_mask):
    k = pl.program_id(1)
    k_last = pl.num_programs(1) - 1

    @pl.when(k == 0)
    def _init():
        m_ref[...] = jnp.full_like(m_ref, -jnp.inf)
        l_ref[...] = jnp.zeros_like(l_ref)
        acc_ref[...] = jnp.zeros_like(acc_ref)

    # Cast only the current tile (keeps HBM/VMEM traffic in the input dtype).
    x = scores_ref[...].astype(jnp.float32)          # [tb, tn]
    c = counts_ref[...].astype(jnp.float32)          # [1, tn]

    if needs_mask:
        # Mask padded lanes of the boundary tile: -inf for the LSE path,
        # 0 for the dot-with-counts path (also kills garbage in pad lanes).
        lane = lax.broadcasted_iota(jnp.int32, x.shape, 1)
        valid = (k * tn + lane) < n_total            # [tb, tn]
        x_neg = jnp.where(valid, x, -jnp.inf)
        x_zero = jnp.where(valid, x, 0.0)
        c = jnp.where(valid[:1, :], c, 0.0)
    else:
        x_neg = x
        x_zero = x

    # Online (streaming) log-sum-exp along the class axis.
    m_old = m_ref[...]                               # [tb, 1]
    m_new = jnp.maximum(m_old, jnp.max(x_neg, axis=1, keepdims=True))
    alpha = jnp.exp(m_old - m_new)                   # rescale previous sum
    l_ref[...] = alpha * l_ref[...] + jnp.sum(jnp.exp(x_neg - m_new),
                                              axis=1, keepdims=True)
    m_ref[...] = m_new

    # Running counts-weighted column sum: acc[i] += sum_k scores[i,k]*count[k].
    acc_ref[...] += jnp.sum(x_zero * c, axis=1, keepdims=True)

    @pl.when(k == k_last)
    def _finalize():
        row_loss = acc_ref[...] * inv_b - m_ref[...] - jnp.log(l_ref[...])
        out_ref[...] = row_loss.astype(out_ref.dtype)


def softmax_loss_allneg(positive, scores, *, tb=None, tn=None):
    """positive: [B, 1] (or [B]) integer indices; scores: [B, N] float."""
    B, N = scores.shape
    truth = positive.reshape(B).astype(jnp.int32)

    # Count histogram over truth indices, computed once on the host/XLA side.
    counts = jnp.zeros((1, N), jnp.float32).at[0, truth].add(1.0)

    # Tile sizes: full dims for small problems, otherwise (8,128)-aligned tiles.
    if tb is None:
        tb = B if B <= 256 else 256           # multiple of 8 when tiling rows
    if tn is None:
        tn = N if N <= 2048 else 2048         # multiple of 128 when tiling N
    needs_mask = (N % tn) != 0

    grid = (pl.cdiv(B, tb), pl.cdiv(N, tn))

    kernel = functools.partial(
        _softmax_loss_allneg_kernel,
        n_total=N, tn=tn, inv_b=1.0 / B, needs_mask=needs_mask,
    )

    cost = pl.CostEstimate(
        flops=6 * B * N,
        transcendentals=B * N,
        bytes_accessed=B * N * scores.dtype.itemsize + N * 4 + B * 4,
    )

    row_loss = pl.pallas_call(
        kernel,
        out_shape=jax.ShapeDtypeStruct((B, 1), jnp.float32),
        grid_spec=pltpu.PrefetchScalarGridSpec(
            num_scalar_prefetch=0,
            grid=grid,
            in_specs=[
                pl.BlockSpec((1, tn), lambda i, k: (0, k)),    # counts
                pl.BlockSpec((tb, tn), lambda i, k: (i, k)),   # scores
            ],
            out_specs=pl.BlockSpec((tb, 1), lambda i, k: (i, 0)),
            scratch_shapes=[
                pltpu.VMEM((tb, 1), jnp.float32),   # running max m
                pltpu.VMEM((tb, 1), jnp.float32),   # running sum l
                pltpu.VMEM((tb, 1), jnp.float32),   # running scores . counts
            ],
        ),
        compiler_params=pltpu.CompilerParams(
            dimension_semantics=("parallel", "arbitrary"),
            vmem_limit_bytes=32 * 1024 * 1024,
        ),
        cost_estimate=cost,
    )(counts, scores)

    return -jnp.mean(row_loss)


def _reference(positive, scores):
    m = jnp.max(scores, axis=1, keepdims=True)
    den = jnp.sum(jnp.exp(scores - m), axis=-1, keepdims=True)
    truth = positive.reshape(positive.shape[0])
    losses = scores[:, truth] - m - jnp.log(den)
    return -jnp.mean(losses)


if __name__ == "__main__":
    key = jax.random.PRNGKey(0)
    k1, k2 = jax.random.split(key)

    # Multi-tile case (N a multiple of the lane tile).
    B, N = 8, 384
    scores = jax.random.normal(k1, (B, N), dtype=jnp.float32)
    positive = jax.random.randint(k2, (B, 1), minval=0, maxval=N,
                                  dtype=jnp.int32)
    loss = jax.block_until_ready(softmax_loss_allneg(positive, scores, tn=128))
    ref = jax.block_until_ready(_reference(positive, scores))
    assert jnp.allclose(loss, ref, rtol=1e-5, atol=1e-5), (loss, ref)

    # Ragged-tail case (N not a multiple of the lane tile -> masked last tile).
    N2 = 200
    scores2 = jax.random.normal(k1, (B, N2), dtype=jnp.float32)
    positive2 = jax.random.randint(k2, (B, 1), minval=0, maxval=N2,
                                   dtype=jnp.int32)
    loss2 = jax.block_until_ready(softmax_loss_allneg(positive2, scores2,
                                                      tn=128))
    ref2 = jax.block_until_ready(_reference(positive2, scores2))
    assert jnp.allclose(loss2, ref2, rtol=1e-5, atol=1e-5), (loss2, ref2)

    print("KERNEL_OK")
</pallas_src>

<mosaic_0001>
module attributes {stable_mosaic.version = 11 : i64} {
  func.func @_softmax_loss_allneg_kernel(%arg0: i32, %arg1: i32, %arg2: memref<1x128xf32, #tpu.memory_space<vmem>>, %arg3: memref<8x128xf32, #tpu.memory_space<vmem>>, %arg4: memref<8x1xf32, #tpu.memory_space<vmem>>, %arg5: memref<8x1xf32, #tpu.memory_space<vmem>>, %arg6: memref<8x1xf32, #tpu.memory_space<vmem>>, %arg7: memref<8x1xf32, #tpu.memory_space<vmem>>) attributes {dimension_semantics = [#tpu.dimension_semantics<parallel>, #tpu.dimension_semantics<arbitrary>], iteration_bounds = array<i64: 1, 3>, scalar_prefetch = 0 : i64, scratch_operands = 3 : i64, tpu.core_type = #tpu.core_type<tc>, window_params = [{transform_indices = @transform_0, window_bounds = array<i64: 1, 128>}, {transform_indices = @transform_1, window_bounds = array<i64: 8, 128>}, {transform_indices = @transform_2, window_bounds = array<i64: 8, 1>}]} {
    %c0_i32 = arith.constant 0 : i32
    %0 = arith.cmpi eq, %arg1, %c0_i32 : i32
    %1 = arith.extui %0 : i1 to i32
    %c0_i32_0 = arith.constant 0 : i32
    %2 = arith.cmpi ne, %1, %c0_i32_0 : i32
    scf.if %2 {
      %cst_19 = arith.constant 0xFF800000 : f32
      %31 = vector.broadcast %cst_19 : f32 to vector<8x1xf32>
      %c0_20 = arith.constant 0 : index
      %c0_21 = arith.constant 0 : index
      %32 = vector.load %arg5[%c0_20, %c0_21] : memref<8x1xf32, #tpu.memory_space<vmem>>, vector<8x1xf32>
      tpu.vector_store %arg5[%c0_20, %c0_21], %31 {strides = array<i32>} : memref<8x1xf32, #tpu.memory_space<vmem>>, vector<8x1xf32>,
      %cst_22 = arith.constant 0.000000e+00 : f32
      %33 = vector.broadcast %cst_22 : f32 to vector<8x1xf32>
      %c0_23 = arith.constant 0 : index
      %c0_24 = arith.constant 0 : index
      %34 = vector.load %arg6[%c0_23, %c0_24] : memref<8x1xf32, #tpu.memory_space<vmem>>, vector<8x1xf32>
      tpu.vector_store %arg6[%c0_23, %c0_24], %33 {strides = array<i32>} : memref<8x1xf32, #tpu.memory_space<vmem>>, vector<8x1xf32>,
      %cst_25 = arith.constant 0.000000e+00 : f32
      %35 = vector.broadcast %cst_25 : f32 to vector<8x1xf32>
      %c0_26 = arith.constant 0 : index
      %c0_27 = arith.constant 0 : index
      %36 = vector.load %arg7[%c0_26, %c0_27] : memref<8x1xf32, #tpu.memory_space<vmem>>, vector<8x1xf32>
      tpu.vector_store %arg7[%c0_26, %c0_27], %35 {strides = array<i32>} : memref<8x1xf32, #tpu.memory_space<vmem>>, vector<8x1xf32>,
    } else {
    }
    %c0 = arith.constant 0 : index
    %c0_1 = arith.constant 0 : index
    %3 = vector.load %arg3[%c0, %c0_1] : memref<8x128xf32, #tpu.memory_space<vmem>>, vector<8x128xf32>
    %c0_2 = arith.constant 0 : index
    %c0_3 = arith.constant 0 : index
    %4 = vector.load %arg2[%c0_2, %c0_3] : memref<1x128xf32, #tpu.memory_space<vmem>>, vector<1x128xf32>
    %c0_4 = arith.constant 0 : index
    %c0_5 = arith.constant 0 : index
    %5 = vector.load %arg5[%c0_4, %c0_5] : memref<8x1xf32, #tpu.memory_space<vmem>>, vector<8x1xf32>
    %cst = arith.constant dense<0xFF800000> : vector<8xf32>
    %6 = vector.multi_reduction <maximumf>, %3, %cst [1] : vector<8x128xf32> to vector<8xf32>
    %7 = vector.shape_cast %6 : vector<8xf32> to vector<8x1xf32>
    %8 = arith.maximumf %5, %7 : vector<8x1xf32>
    %9 = arith.subf %5, %8 : vector<8x1xf32>
    %10 = math.exp %9 : vector<8x1xf32>
    %c0_6 = arith.constant 0 : index
    %c0_7 = arith.constant 0 : index
    %11 = vector.load %arg6[%c0_6, %c0_7] : memref<8x1xf32, #tpu.memory_space<vmem>>, vector<8x1xf32>
    %12 = arith.mulf %10, %11 : vector<8x1xf32>
    %13 = vector.broadcast %8 : vector<8x1xf32> to vector<8x128xf32>
    %14 = arith.subf %3, %13 : vector<8x128xf32>
    %15 = math.exp %14 : vector<8x128xf32>
    %cst_8 = arith.constant dense<0.000000e+00> : vector<8xf32>
    %16 = vector.multi_reduction <add>, %15, %cst_8 [1] : vector<8x128xf32> to vector<8xf32>
    %17 = vector.shape_cast %16 : vector<8xf32> to vector<8x1xf32>
    %18 = arith.addf %12, %17 : vector<8x1xf32>
    %c0_9 = arith.constant 0 : index
    %c0_10 = arith.constant 0 : index
    %19 = vector.load %arg6[%c0_9, %c0_10] : memref<8x1xf32, #tpu.memory_space<vmem>>, vector<8x1xf32>
    tpu.vector_store %arg6[%c0_9, %c0_10], %18 {strides = array<i32>} : memref<8x1xf32, #tpu.memory_space<vmem>>, vector<8x1xf32>,
    %c0_11 = arith.constant 0 : index
    %c0_12 = arith.constant 0 : index
    %20 = vector.load %arg5[%c0_11, %c0_12] : memref<8x1xf32, #tpu.memory_space<vmem>>, vector<8x1xf32>
    tpu.vector_store %arg5[%c0_11, %c0_12], %8 {strides = array<i32>} : memref<8x1xf32, #tpu.memory_space<vmem>>, vector<8x1xf32>,
    %c0_13 = arith.constant 0 : index
    %c0_14 = arith.constant 0 : index
    %21 = vector.load %arg7[%c0_13, %c0_14] : memref<8x1xf32, #tpu.memory_space<vmem>>, vector<8x1xf32>
    %22 = vector.broadcast %4 : vector<1x128xf32> to vector<8x128xf32>
    %23 = arith.mulf %3, %22 : vector<8x128xf32>
    %cst_15 = arith.constant dense<0.000000e+00> : vector<8xf32>
    %24 = vector.multi_reduction <add>, %23, %cst_15 [1] : vector<8x128xf32> to vector<8xf32>
    %25 = vector.shape_cast %24 : vector<8xf32> to vector<8x1xf32>
    %26 = arith.addf %21, %25 : vector<8x1xf32>
    %c0_16 = arith.constant 0 : index
    %c0_17 = arith.constant 0 : index
    %27 = vector.load %arg7[%c0_16, %c0_17] : memref<8x1xf32, #tpu.memory_space<vmem>>, vector<8x1xf32>
    tpu.vector_store %arg7[%c0_16, %c0_17], %26 {strides = array<i32>} : memref<8x1xf32, #tpu.memory_space<vmem>>, vector<8x1xf32>,
    %c2_i32 = arith.constant 2 : i32
    %28 = arith.cmpi eq, %arg1, %c2_i32 : i32
    %29 = arith.extui %28 : i1 to i32
    %c0_i32_18 = arith.constant 0 : i32
    %30 = arith.cmpi ne, %29, %c0_i32_18 : i32
    scf.if %30 {
      %c0_19 = arith.constant 0 : index
      %c0_20 = arith.constant 0 : index
      %31 = vector.load %arg7[%c0_19, %c0_20] : memref<8x1xf32, #tpu.memory_space<vmem>>, vector<8x1xf32>
      %cst_21 = arith.constant 1.250000e-01 : f32
      %32 = vector.broadcast %cst_21 : f32 to vector<8x1xf32>
      %33 = arith.mulf %31, %32 : vector<8x1xf32>
      %c0_22 = arith.constant 0 : index
      %c0_23 = arith.constant 0 : index
      %34 = vector.load %arg5[%c0_22, %c0_23] : memref<8x1xf32, #tpu.memory_space<vmem>>, vector<8x1xf32>
      %35 = arith.subf %33, %34 : vector<8x1xf32>
      %c0_24 = arith.constant 0 : index
      %c0_25 = arith.constant 0 : index
      %36 = vector.load %arg6[%c0_24, %c0_25] : memref<8x1xf32, #tpu.memory_space<vmem>>, vector<8x1xf32>
      %37 = math.log %36 : vector<8x1xf32>
      %38 = arith.subf %35, %37 : vector<8x1xf32>
      %c0_26 = arith.constant 0 : index
      %c0_27 = arith.constant 0 : index
      %39 = vector.load %arg4[%c0_26, %c0_27] : memref<8x1xf32, #tpu.memory_space<vmem>>, vector<8x1xf32>
      tpu.vector_store %arg4[%c0_26, %c0_27], %38 {strides = array<i32>} : memref<8x1xf32, #tpu.memory_space<vmem>>, vector<8x1xf32>,
    } else {
    }
    return
  }
  func.func @transform_0(%arg0: i32, %arg1: i32) -> (i32, i32) {
    %c0_i32 = arith.constant 0 : i32
    %c0_i32_0 = arith.constant 0 : i32
    return %c0_i32, %arg1 : i32, i32
  }
  func.func @transform_1(%arg0: i32, %arg1: i32) -> (i32, i32) {
    %c0_i32 = arith.constant 0 : i32
    return %arg0, %arg1 : i32, i32
  }
  func.func @transform_2(%arg0: i32, %arg1: i32) -> (i32, i32) {
    %c0_i32 = arith.constant 0 : i32
    %c0_i32_0 = arith.constant 0 : i32
    return %arg0, %c0_i32 : i32, i32
  }
}

</mosaic_0001>

<llo_original>
// kernel: tpu_custom_call.1
$region0: #{tpu_custom_call.1}
  #allocation0 [shape = 'u32[]', space=smem, size = 0x4, offset = 0x4, fixed_abs, tag = 'smem constant byte address 0x4 - core index']
  #allocation1 [shape = 'u32[144,128]{1,0:T(1,128)}', space=vmem, size = 0x12000, scoped, tag = 'internal scratch']
  #allocation2 [shape = 'f32[8,1]{1,0:T(8,128)}', space=vmem, size = 0x1000, scoped, tag = 'scratch operand']
  #allocation3 [shape = 'f32[8,1]{1,0:T(8,128)}', space=vmem, size = 0x1000, scoped, tag = 'scratch operand']
  #allocation4 [shape = 'f32[8,1]{1,0:T(8,128)}', space=vmem, size = 0x1000, scoped, tag = 'scratch operand']
  %s0 = inlined_call_operand.hbm [shape: f32[1,384], index: 0, kind: input, shape index: {}]
  %s1 = inlined_call_operand.hbm [shape: f32[8,384], index: 1, kind: input, shape index: {}]
  %s2 = inlined_call_operand.vmem [shape: f32[8,1], index: 2, kind: output, shape index: {}]
  %s3 = sld [smem:[#allocation0]]
  $region57: #{tpu_custom_call.1} parent=0
    _
  %s5 = ssub.s32 1, %s3
  %s6 = scalar_select 0, %s5, %s3
  $region1: #{tpu_custom_call.1} parent=0
    #allocation5 [shape = 'u8[1024]{0}', space=vmem, size = 0x400, scoped, tag = 'input window, operand 0']
    #allocation6 [shape = 's32[2]{0}', space=sflag, size = 0x8, scoped, tag = 'scoped memory for tpu_custom_call.1']
    #allocation7 [shape = 'u8[8192]{0}', space=vmem, size = 0x2000, scoped, tag = 'input window, operand 1']
    #allocation8 [shape = 's32[2]{0}', space=sflag, size = 0x8, scoped, tag = 'scoped memory for tpu_custom_call.1']
    %7 = vsyncpa [#allocation6], 0
    %s8 = scalar_lea.sflag [#allocation6], 1
    %9 = vsyncpa %s8, 0
    %10 = vsyncpa [#allocation8], 0
    %s11 = scalar_lea.sflag [#allocation8], 1
    %12 = vsyncpa %s11, 0
    loop: start=0, step=1, limit=5
    $region2: #{tpu_custom_call.1} parent=1 // loop_pre_header
      _
    $region3: #{tpu_custom_call.1} parent=1 // loop_header
      %s14 = sphi 0, %s18
      %p15 = scmp.ge.s32.totalorder %s14, 5
      %s21 = sphi 0, %s33
      %s22 = sphi 0, %s29
      %s23 = sphi 0, %s21
      %s24 = sphi 0, %s22
      %s25 = sphi 0, %s23
      %s26 = sphi 0, %s24
      %s36 = sphi 0, %s38
      %s39 = sphi 0, %s36
      %s40 = sphi 0, %s39
      %s56 = sphi 0, %s40
      %s64 = sphi 0, %s66
      %s67 = sphi 0, %s64
      %s68 = sphi 0, %s67
      %s84 = sphi 0, %s68
      %s90 = sphi 0, %s92
      %s93 = sphi 0, %s90
      %s94 = sphi 0, %s93
      %s110 = sphi 0, %s94
    $region4: #{tpu_custom_call.1} parent=1 // loop_header_branch
      %17 = sbr.rel (%p15) target = $region8
    $region5: #{tpu_custom_call.1} parent=1 // loop_body
      %s19 = ssub.s32 %s14, 1
      %s20 = ssub.s32 %s14, 2
      %s27 = sadd.s32 1, %s22
      %p28 = scmp.ge.s32.totalorder %s27, 3
      %s29 = scalar_select %p28, 0, %s27
      %s30 = sadd.s32 1, %s21
      %s31 = scalar_select %p28, %s30, %s21
      %p32 = scmp.ge.s32.totalorder %s31, 1
      %s33 = scalar_select %p32, 0, %s31
      %s34 = ssub.s32 %s22, %s29
      %p35 = scmp.eq.s32.totalorder %s34, 0
      %s37 = sadd.s32 %s36, 1
      %s38 = scalar_select %p35, %s36, %s37
      %p41 = pneg %p35
      %p42 = scmp.eq.s32.totalorder %s14, 2
      %p43 = por %p41, %p42
      %p44 = scmp.ne.s32.totalorder %s36, %s39
      %p45 = scmp.eq.s32.totalorder %s14, 0
      %p46 = por %p44, %p45
      %p47 = scmp.ne.s32.totalorder %s36, %s39
      %p48 = scmp.eq.s32.totalorder %s19, 2
      %p49 = por %p47, %p48
      %p50 = scmp.ne.s32.totalorder %s39, %s40
      %p51 = scmp.eq.s32.totalorder %s19, 0
      %p52 = por %p50, %p51
      %p53 = scmp.ne.s32.totalorder %s39, %s40
      %p54 = scmp.eq.s32.totalorder %s20, 2
      %p55 = por %p53, %p54
      %p57 = scmp.ne.s32.totalorder %s40, %s56
      %p58 = scmp.eq.s32.totalorder %s20, 0
      %p59 = por %p57, %p58
      %s60 = ssub.s32 %s21, %s33
      %s61 = ssub.s32 %s22, %s29
      %s62 = sor.u32 %s60, %s61
      %p63 = scmp.eq.s32.totalorder %s62, 0
      %s65 = sadd.s32 %s64, 1
      %s66 = scalar_select %p63, %s64, %s65
      %p69 = pneg %p63
      %p70 = scmp.eq.s32.totalorder %s14, 2
      %p71 = por %p69, %p70
      %p72 = scmp.ne.s32.totalorder %s64, %s67
      %p73 = scmp.eq.s32.totalorder %s14, 0
      %p74 = por %p72, %p73
      %p75 = scmp.ne.s32.totalorder %s64, %s67
      %p76 = scmp.eq.s32.totalorder %s19, 2
      %p77 = por %p75, %p76
      %p78 = scmp.ne.s32.totalorder %s67, %s68
      %p79 = scmp.eq.s32.totalorder %s19, 0
      %p80 = por %p78, %p79
      %p81 = scmp.ne.s32.totalorder %s67, %s68
      %p82 = scmp.eq.s32.totalorder %s20, 2
      %p83 = por %p81, %p82
      %p85 = scmp.ne.s32.totalorder %s68, %s84
      %p86 = scmp.eq.s32.totalorder %s20, 0
      %p87 = por %p85, %p86
      %s88 = ssub.s32 %s21, %s33
      %p89 = scmp.eq.s32.totalorder %s88, 0
      %s91 = sadd.s32 %s90, 1
      %s92 = scalar_select %p89, %s90, %s91
      %p95 = pneg %p89
      %p96 = scmp.eq.s32.totalorder %s14, 2
      %p97 = por %p95, %p96
      %p98 = scmp.ne.s32.totalorder %s90, %s93
      %p99 = scmp.eq.s32.totalorder %s14, 0
      %p100 = por %p98, %p99
      %p101 = scmp.ne.s32.totalorder %s90, %s93
      %p102 = scmp.eq.s32.totalorder %s19, 2
      %p103 = por %p101, %p102
      %p104 = scmp.ne.s32.totalorder %s93, %s94
      %p105 = scmp.eq.s32.totalorder %s19, 0
      %p106 = por %p104, %p105
      %p107 = scmp.ne.s32.totalorder %s93, %s94
      %p108 = scmp.eq.s32.totalorder %s20, 2
      %p109 = por %p107, %p108
      %p111 = scmp.ne.s32.totalorder %s94, %s110
      %p112 = scmp.eq.s32.totalorder %s20, 0
      %p113 = por %p111, %p112
      %p114 = scmp.le.s32.totalorder 1, %s14
      %p115 = scmp.lt.s32.totalorder %s14, 4
      %p116 = pnand %p114, %p115
      %p117 = pneg %p116
      // Predicated region
      $region9: #{tpu_custom_call.1} parent=5 // pred_check
        _
      $region10: #{tpu_custom_call.1} parent=5 // pred_check_branch
        %119 = sbr.rel (%p116) target = $region12
      $region11: #{tpu_custom_call.1} parent=5 // pred_region
        %s120 = ssub.s32 %s14, 1
      $region12: #{tpu_custom_call.1} parent=5 // pred_fallthru
        _
      %p121 = scmp.lt.s32.totalorder %s14, 3
      // Predicated region
      $region13: #{tpu_custom_call.1} parent=5 // pred_check
        %p122 = pneg %p121
      $region14: #{tpu_custom_call.1} parent=5 // pred_check_branch
        %124 = sbr.rel (%p122) target = $region16
      $region15: #{tpu_custom_call.1} parent=5 // pred_region
        // Predicated region
        $region17: #{tpu_custom_call.1} parent=15 // pred_check
          %p125 = pneg %p46
        $region18: #{tpu_custom_call.1} parent=15 // pred_check_branch
          %127 = sbr.rel (%p125) target = $region20
        $region19: #{tpu_custom_call.1} parent=15 // pred_region
          %s128 = sand.u32 %s36, 1
          %s129 = scalar_lea.sflag [#allocation6], %s128
          %s130 = sand.u32 %s36, 1
          %s131 = scalar_lea.vmem [#allocation5], %s130
          %s133 = ssub.s32 16, 16
          %134 = vsyncadd %s129, %s133
          %s135 = smul.addr %s22, 16
          %s136 = scalar_lea.hbm %s0, %s135
          %s138 = sshll.u32 %s131, 4
          %s139 = int_to_ptr.vmem [resolvable:$true] %s138
          %141 = dma.hbm_to_vmem [thread:$0]  %s136, 16, %s139, %s129
        $region20: #{tpu_custom_call.1} parent=15 // pred_fallthru
          _
        // Predicated region
        $region21: #{tpu_custom_call.1} parent=15 // pred_check
          %p142 = pneg %p74
        $region22: #{tpu_custom_call.1} parent=15 // pred_check_branch
          %144 = sbr.rel (%p142) target = $region24
        $region23: #{tpu_custom_call.1} parent=15 // pred_region
          %s145 = sand.u32 %s64, 1
          %s146 = scalar_lea.sflag [#allocation8], %s145
          %s147 = sand.u32 %s64, 1
          %s148 = smul.addr %s147, 8
          %s149 = scalar_lea.vmem [#allocation7], %s148
          %s151 = ssub.s32 128, 128
          %152 = vsyncadd %s146, %s151
          %s153 = smul.addr %s21, 3
          %s154 = sadd.s32 %s22, %s153
          %s155 = smul.addr %s154, 128
          %s156 = scalar_lea.hbm %s1, %s155
          %s158 = sshll.u32 %s149, 4
          %s159 = int_to_ptr.vmem [resolvable:$true] %s158
          %161 = dma.hbm_to_vmem [thread:$0]  %s156, 128, %s159, %s146
        $region24: #{tpu_custom_call.1} parent=15 // pred_fallthru
          _
      $region16: #{tpu_custom_call.1} parent=5 // pred_fallthru
        _
      %p162 = scmp.le.s32.totalorder 1, %s14
      %p163 = scmp.lt.s32.totalorder %s14, 4
      %p164 = pnand %p162, %p163
      %p165 = pneg %p164
      // Predicated region
      $region25: #{tpu_custom_call.1} parent=5 // pred_check
        _
      $region26: #{tpu_custom_call.1} parent=5 // pred_check_branch
        %167 = sbr.rel (%p164) target = $region28
      $region27: #{tpu_custom_call.1} parent=5 // pred_region
        %s168 = ssub.s32 %s14, 1
        %s169 = sand.u32 %s39, 1
        %s170 = scalar_lea.sflag [#allocation6], %s169
        %s171 = sand.u32 %s39, 1
        %s172 = scalar_lea.vmem [#allocation5], %s171
        // Predicated region
        $region29: #{tpu_custom_call.1} parent=27 // pred_check
          %p173 = pneg %p52
        $region30: #{tpu_custom_call.1} parent=27 // pred_check_branch
          %175 = sbr.rel (%p173) target = $region32
        $region31: #{tpu_custom_call.1} parent=27 // pred_region
          %176 = dma.done %s170, 16
        $region32: #{tpu_custom_call.1} parent=27 // pred_fallthru
          _
        %s177 = sand.u32 %s67, 1
        %s178 = scalar_lea.sflag [#allocation8], %s177
        %s179 = sand.u32 %s67, 1
        %s180 = smul.addr %s179, 8
        %s181 = scalar_lea.vmem [#allocation7], %s180
        // Predicated region
        $region33: #{tpu_custom_call.1} parent=27 // pred_check
          %p182 = pneg %p80
        $region34: #{tpu_custom_call.1} parent=27 // pred_check_branch
          %184 = sbr.rel (%p182) target = $region36
        $region35: #{tpu_custom_call.1} parent=27 // pred_region
          %185 = dma.done %s178, 128
        $region36: #{tpu_custom_call.1} parent=27 // pred_fallthru
          _
        %s186 = sand.u32 %s39, 1
        %s187 = scalar_lea.sflag [#allocation6], %s186
        %s188 = sand.u32 %s39, 1
        %s189 = scalar_lea.vmem [#allocation5], %s188
        %p190 = pneg %p52
        %p191 = pneg %p49
        %s192 = sand.u32 %s67, 1
        %s193 = scalar_lea.sflag [#allocation8], %s192
        %s194 = sand.u32 %s67, 1
        %s195 = smul.addr %s194, 8
        %s196 = scalar_lea.vmem [#allocation7], %s195
        %p197 = pneg %p80
        %p198 = pneg %p77
        %p199 = pneg %p106
        %p200 = pneg %p103
        %p201 = scmp.lt.s32.totalorder %s23, 0
        %s202 = scalar_select %p201, %s23, 0
        %s203 = smul.addr %s202, 8
        %s204 = scalar_lea.vmem %s2, %s203
        %p205 = scmp.lt.s32.totalorder %s23, 0
        %s206 = scalar_select %p205, %s23, 0
        %s207 = smul.addr %s206, 8
        %s208 = scalar_lea.vmem %s2, %s207
        %p209 = scmp.eq.s32.totalorder %s24, 0
        // Predicated region
        $region37: #{tpu_custom_call.1} parent=27 // pred_check
          %p210 = pneg %p209
        $region38: #{tpu_custom_call.1} parent=27 // pred_check_branch
          %212 = sbr.rel (%p210) target = $region40
        $region39: #{tpu_custom_call.1} parent=27 // pred_region
          %vm213 = vcmask 7168
          %214 = vst.msk [vmem:[#allocation2] sm:$0xff] %vm213, -inf
          %215 = vst.msk [vmem:[#allocation3] sm:$0xff] %vm213, 0.0
          %216 = vst.msk [vmem:[#allocation4] sm:$0xff] %vm213, 0.0
        $region40: #{tpu_custom_call.1} parent=27 // pred_fallthru
          _
        %v217 = vld [vmem:[%s181] sm:$0xff]
        %v218 = vld [vmem:[%s172] sm:$0x1]
        %v219 = vld [vmem:[#allocation2] sm:$0xff]
        %220 = vmax.xlane.f32.xlu0 %v217
        %v221 = vpop.xlane.xlu0 %220
        %v222 = vmax.f32 %v219, %v221
        %v223 = vsub.f32 %v219, %v222
        %v224 = vmul.f32 %v223, 1.442695
        %v225 = vpow.pop %v224
        %v226 = vld [vmem:[#allocation3] sm:$0xff]
        %v227 = vmul.f32 %v225, %v226
        %229 = vset.pattern.permute.xlu0 0
        %230 = vperm.xlu0 %229, %v222
        %v231 = vpop.permute.xlu0 %230
        %v233 = vsub.f32 %v217, %v231
        %v234 = vmul.f32 %v233, 1.442695
        %v235 = vpow.pop %v234
        %236 = vadd.xlane.f32.xlu0 %v235
        %v237 = vpop.xlane.xlu0 %236
        %v238 = vadd.f32 %v227, %v237
        %vm239 = vcmask 7168
        %240 = vst.msk [vmem:[#allocation3] sm:$0xff] %vm239, %v238
        %241 = vst.msk [vmem:[#allocation2] sm:$0xff] %vm239, %v222
        %v242 = vld [vmem:[#allocation4] sm:$0xff]
        %v244 = vlaneseq
        %v245 = vshrl.u32 %v244, 7
        %v246 = vsub.s32 0, %v245
        %v247 = vrot.slane %v218, %v246
        %v249 = vmul.f32 %v217, %v247
        %250 = vadd.xlane.f32.xlu0 %v249
        %v251 = vpop.xlane.xlu0 %250
        %v252 = vadd.f32 %v242, %v251
        %253 = vst.msk [vmem:[#allocation4] sm:$0xff] %vm239, %v252
        %p254 = scmp.eq.s32.totalorder %s24, 2
        // Predicated region
        $region41: #{tpu_custom_call.1} parent=27 // pred_check
          %p255 = pneg %p254
        $region42: #{tpu_custom_call.1} parent=27 // pred_check_branch
          %257 = sbr.rel (%p255) target = $region44
        $region43: #{tpu_custom_call.1} parent=27 // pred_region
          %v258 = vld [vmem:[#allocation4] sm:$0xff]
          %v259 = vmul.f32 %v258, 0.125
          %v260 = vld [vmem:[#allocation2] sm:$0xff]
          %v261 = vsub.f32 %v259, %v260
          %v262 = vld [vmem:[#allocation3] sm:$0xff]
          %v263 = vlog2.pop %v262
          %v264 = vmul.f32 %v263, 0.6931472
          %v265 = vsub.f32 %v261, %v264
          %266 = vst.msk [vmem:[%s208] sm:$0xff] %vm239, %v265
        $region44: #{tpu_custom_call.1} parent=27 // pred_fallthru
          _
        %p267 = scmp.lt.s32.totalorder %s23, 0
        %s268 = scalar_select %p267, %s23, 0
        %s269 = smul.addr %s268, 8
        %s270 = scalar_lea.vmem %s2, %s269
        // Predicated region
        $region45: #{tpu_custom_call.1} parent=27 // pred_check
          %p271 = pneg %p103
        $region46: #{tpu_custom_call.1} parent=27 // pred_check_branch
          %273 = sbr.rel (%p271) target = $region48
        $region47: #{tpu_custom_call.1} parent=27 // pred_region
          _
        $region48: #{tpu_custom_call.1} parent=27 // pred_fallthru
          _
        // Predicated region
        $region49: #{tpu_custom_call.1} parent=27 // pred_check
          %p274 = pneg %p103
        $region50: #{tpu_custom_call.1} parent=27 // pred_check_branch
          %276 = sbr.rel (%p274) target = $region52
        $region51: #{tpu_custom_call.1} parent=27 // pred_region
          %p277 = scmp.lt.s32.totalorder %s23, 0
          %s278 = scalar_select %p277, %s23, 0
          %s279 = smul.addr %s278, 8
          %s280 = scalar_lea.vmem %s2, %s279
        $region52: #{tpu_custom_call.1} parent=27 // pred_fallthru
          _
      $region28: #{tpu_custom_call.1} parent=5 // pred_fallthru
        _
      %p281 = scmp.le.s32.totalorder 2, %s14
      // Predicated region
      $region53: #{tpu_custom_call.1} parent=5 // pred_check
        %p282 = pneg %p281
      $region54: #{tpu_custom_call.1} parent=5 // pred_check_branch
        %284 = sbr.rel (%p282) target = $region56
      $region55: #{tpu_custom_call.1} parent=5 // pred_region
        %s285 = ssub.s32 %s14, 2
      $region56: #{tpu_custom_call.1} parent=5 // pred_fallthru
        _
    $region6: #{tpu_custom_call.1} parent=1 // loop_footer
      %s18 = sadd.s32 1, %s14
    $region7: #{tpu_custom_call.1} parent=1 // loop_footer_branch
      %13 = sbr.rel target = $region3
    $region8: #{tpu_custom_call.1} parent=1 // loop_exit
      _
    %286 = vsyncpa [#allocation6], 1
    %s287 = scalar_lea.sflag [#allocation6], 1
    %288 = vsyncpa %s287, 1
    %289 = vsyncpa [#allocation8], 1
    %s290 = scalar_lea.sflag [#allocation8], 1
    %291 = vsyncpa %s290, 1

</llo_original>
